<compile_context>
chip_gen: v7x
topology: tpu7x:2x2x1
jax: 0.10.0
libtpu: 0.0.40
codegen_flags: <defaults>
</compile_context>

<pallas_src>
import functools

import jax
import jax.numpy as jnp
from jax import lax
from jax.experimental import pallas as pl
from jax.experimental.pallas import tpu as pltpu


# MXU operand dtype (accumulation is always f32). Set to jnp.float32 for bit-exact f32 math.
MATMUL_DTYPE = jnp.bfloat16
# Storage dtype for the hoisted input-side gates in VMEM (halves VMEM residency / vld traffic).
GX_DTYPE = jnp.bfloat16


# ----------------------------- sizing helpers -----------------------------

def _vmem_limit_bytes():
    """~75% of per-core VMEM: ~96 MiB on v5e/v6e (128 MiB), ~48 MiB on v7x (64 MiB)."""
    try:
        cap = int(pltpu.get_tpu_info().vmem_capacity_bytes)
    except Exception:
        cap = 64 * 1024 * 1024      # conservative (v7x-sized) fallback
    return min((cap * 3) // 4, 100 * 1024 * 1024)


def _num_tensorcores():
    try:
        return max(1, int(getattr(jax.devices()[0], "num_cores", 1)))
    except Exception:
        return 1


def _row_block(n, target=512):
    """Largest row tile <= target that divides n and is sublane-aligned (mult of 8), else n.
    Worst case falls back to 8 (n mult of 8) or the full dim (single, possibly large block)."""
    if n <= target:
        return n
    for r in range(target, 7, -1):
        if n % r == 0 and r % 8 == 0:
            return r
    return n


def _batch_block(b_pad, t, h, vmem_budget):
    """Largest 8-aligned divisor of the (padded) batch whose fused-layer VMEM footprint fits.

    Per (t, b) element resident in the fused kernel:
      x block f32 x2(dbuf) + out f32 x2(dbuf) + gxf/gxb (8H of GX_DTYPE) + bwd f32  ~= 36H bytes.
    """
    gx_bytes = jnp.dtype(GX_DTYPE).itemsize
    per_tb = h * (4 * 2 + 4 * 2 + 8 * gx_bytes + 4)
    fixed = 48 * h * h * jnp.dtype(MATMUL_DTYPE).itemsize * 2 + (4 << 20)   # weights (dbuf) + headroom
    best = 8
    for bb in range(8, b_pad + 1, 8):
        if b_pad % bb == 0 and fixed + t * bb * per_tb <= vmem_budget:
            best = bb
    # On multi-TensorCore parts (v7x) keep >=2 grid steps so the "parallel" axis can shard.
    if best == b_pad and b_pad >= 16 and (b_pad // 2) % 8 == 0 and _num_tensorcores() >= 2:
        best = b_pad // 2
    return best


# ----------------------------- first linear (Conv1d I->H, k=1) -----------------------------
# TODO(synk): fuse this VPU-only layer into the layer-0 recurrence kernel to skip one
# (T*B, H) HBM write+read and the lane-padded (R, I) input block.

def _first_linear_kernel(x_ref, w_ref, b_ref, o_ref, *, n_in):
    # x_ref: (R, I), w_ref: (I, H), b_ref: (1, H), o_ref: (R, H)
    # K = I is tiny (e.g. 4): unrolled VPU broadcast-FMAs instead of a K-padded MXU pass.
    acc = jnp.broadcast_to(b_ref[...], o_ref.shape).astype(jnp.float32)
    for i in range(n_in):
        acc = acc + x_ref[:, i:i + 1] * w_ref[i:i + 1, :]
    o_ref[...] = acc.astype(o_ref.dtype)


def first_linear(x, w, b, *, vmem_limit):
    # x: (N, I), w: (I, H), b: (1, H) -> (N, H)
    N, I = x.shape
    H = w.shape[1]
    R = _row_block(N)
    return pl.pallas_call(
        functools.partial(_first_linear_kernel, n_in=I),
        out_shape=jax.ShapeDtypeStruct((N, H), jnp.float32),
        grid=(N // R,),
        in_specs=[
            pl.BlockSpec((R, I), lambda i: (i, 0)),
            pl.BlockSpec((I, H), lambda i: (0, 0)),
            pl.BlockSpec((1, H), lambda i: (0, 0)),
        ],
        out_specs=pl.BlockSpec((R, H), lambda i: (i, 0)),
        compiler_params=pltpu.CompilerParams(
            dimension_semantics=("parallel",), vmem_limit_bytes=vmem_limit),
    )(x, w, b)


# ------------- fused BRNN layer: in-VMEM gate matmul + merged fwd/bwd recurrence + residual -------------

def _bilstm_kernel(x_ref, wih_ref, whh_ref, o_ref, gxf_ref, gxb_ref, bwd_ref, *, T, H, unroll):
    # x_ref:   (T, Bb, H)   residual input (f32)
    # wih_ref: (H, 8H)      [Wih_f | Wih_b]  (MATMUL_DTYPE), PyTorch gate order i,f,g,o / direction
    # whh_ref: (2H, 8H)     blockdiag(Whh_f, Whh_b) (MATMUL_DTYPE), bias=False
    # o_ref:   (T, Bb, H)   output = x + h_fwd + h_bwd (f32)
    # gxf/gxb: (T, Bb, 4H)  VMEM scratch, hoisted input-side gates per direction (GX_DTYPE)
    # bwd_ref: (T, Bb, H)   VMEM scratch for backward hiddens (bulk-added at the end)
    Bb = x_ref.shape[1]
    H4 = 4 * H

    # ---- phase 1: hoisted input-side gate matmul, computed in VMEM (no HBM round-trip) ----
    wih = wih_ref[...]                                       # (H, 8H)
    t_chunk = max(1, 512 // Bb)                              # bound each dot result to ~2 MiB f32
    t0 = 0
    while t0 < T:                                            # static Python loop (T, Bb static)
        tc = min(t_chunk, T - t0)
        xc = x_ref[t0:t0 + tc].reshape(tc * Bb, H).astype(MATMUL_DTYPE)
        g = jnp.dot(xc, wih, preferred_element_type=jnp.float32)      # (tc*Bb, 8H) one MXU pass
        g = g.reshape(tc, Bb, 8 * H)
        gxf_ref[t0:t0 + tc] = g[:, :, :H4].astype(GX_DTYPE)
        gxb_ref[t0:t0 + tc] = g[:, :, H4:].astype(GX_DTYPE)
        t0 += tc
    # TODO(synk): for very long T, stream x / gx in time chunks from HBM (pl.ANY +
    # make_async_copy double-buffering) instead of holding full-T blocks in VMEM (v7x 64 MiB).

    # ---- phase 2: merged forward/backward recurrence ----
    whh = whh_ref[...]                                       # (2H, 8H) block-diagonal

    def gate_split(gates):                                   # gates: (Bb, 4H) f32
        i_g = jax.nn.sigmoid(gates[:, 0:H])
        f_g = jax.nn.sigmoid(gates[:, H:2 * H])
        g_g = jnp.tanh(gates[:, 2 * H:3 * H])
        o_g = jax.nn.sigmoid(gates[:, 3 * H:4 * H])
        return i_g, f_g, g_g, o_g

    zeros = jnp.zeros((Bb, H), jnp.float32)

    def body(s, carry):
        h_f, c_f, h_b, c_b = carry
        tb = T - 1 - s
        # one block-diagonal matmul covers both directions (fills 2H=256 contraction depth)
        hcat = jnp.concatenate([h_f, h_b], axis=-1).astype(MATMUL_DTYPE)      # (Bb, 2H)
        rec = jnp.dot(hcat, whh, preferred_element_type=jnp.float32)          # (Bb, 8H) f32
        # forward direction at t = s
        gates_f = gxf_ref[s].astype(jnp.float32) + rec[:, :H4]
        i_g, f_g, g_g, o_g = gate_split(gates_f)
        c_f = f_g * c_f + i_g * g_g
        h_f = o_g * jnp.tanh(c_f)
        o_ref[s] = x_ref[s] + h_f                            # residual + fwd contribution
        # backward direction at t = T-1-s (independent chain -> interleaves with fwd)
        gates_b = gxb_ref[tb].astype(jnp.float32) + rec[:, H4:]
        i_g, f_g, g_g, o_g = gate_split(gates_b)
        c_b = f_g * c_b + i_g * g_g
        h_b = o_g * jnp.tanh(c_b)
        bwd_ref[tb] = h_b
        return (h_f, c_f, h_b, c_b)

    lax.fori_loop(0, T, body, (zeros, zeros, zeros, zeros), unroll=unroll)

    # single bulk add of the backward contribution (bwd_ref fully written above)
    o_ref[...] = o_ref[...] + bwd_ref[...]


def bilstm_residual(x, w_ih_cat, whh_bd, *, Bb, vmem_limit):
    # x: (T, Bp, H) f32, w_ih_cat: (H, 8H), whh_bd: (2H, 8H) -> (T, Bp, H)
    T, Bp, H = x.shape
    unroll = 4 if T % 4 == 0 else (2 if T % 2 == 0 else 1)
    kernel = functools.partial(_bilstm_kernel, T=T, H=H, unroll=unroll)
    return pl.pallas_call(
        kernel,
        out_shape=jax.ShapeDtypeStruct((T, Bp, H), jnp.float32),
        grid=(Bp // Bb,),
        in_specs=[
            pl.BlockSpec((T, Bb, H), lambda b: (0, b, 0)),
            pl.BlockSpec((H, 8 * H), lambda b: (0, 0)),
            pl.BlockSpec((2 * H, 8 * H), lambda b: (0, 0)),
        ],
        out_specs=pl.BlockSpec((T, Bb, H), lambda b: (0, b, 0)),
        scratch_shapes=[
            pltpu.VMEM((T, Bb, 4 * H), GX_DTYPE),
            pltpu.VMEM((T, Bb, 4 * H), GX_DTYPE),
            pltpu.VMEM((T, Bb, H), jnp.float32),
        ],
        compiler_params=pltpu.CompilerParams(
            dimension_semantics=("parallel",), vmem_limit_bytes=vmem_limit),
    )(x, w_ih_cat, whh_bd)


# ----------------------------- last linear (Conv1d H->1, k=1) + sigmoid -----------------------------

def _last_linear_kernel(h_ref, w_ref, b_ref, o_ref):
    # h_ref: (Tt, B, H), w_ref: (1, H), b_ref: (1, 1), o_ref: (Tt, B)
    # Cout == 1: VPU multiply + cross-lane reduction instead of a degenerate N=1 MXU matmul.
    w = w_ref[...]                                      # (1, H)
    z = jnp.sum(h_ref[...] * w[None, :, :], axis=-1)    # (Tt, B)
    o_ref[...] = jax.nn.sigmoid(z + b_ref[...]).astype(o_ref.dtype)


def last_linear_sigmoid(h, w2, b2, *, vmem_limit):
    # h: (T, B, H) -> (B, T)
    T, B, H = h.shape
    Tt = _row_block(T, target=256)          # modest tile bounds (Tt, B, H) blocks for large B
    y_tb = pl.pallas_call(
        _last_linear_kernel,
        out_shape=jax.ShapeDtypeStruct((T, B), jnp.float32),
        grid=(T // Tt,),
        in_specs=[
            pl.BlockSpec((Tt, B, H), lambda i: (i, 0, 0)),
            pl.BlockSpec((1, H), lambda i: (0, 0)),
            pl.BlockSpec((1, 1), lambda i: (0, 0)),
        ],
        out_specs=pl.BlockSpec((Tt, B), lambda i: (i, 0)),
        compiler_params=pltpu.CompilerParams(
            dimension_semantics=("parallel",), vmem_limit_bytes=vmem_limit),
    )(h, w2, b2)
    # (T, B) -> (B, T): tiny; the H-sized activation is never transposed.
    return jnp.transpose(y_tb)


# ----------------------------- parameters (deterministic synthetic init) -----------------------------

def init_params(key, I, H, L):
    keys = jax.random.split(key, 4 + 4 * L)
    it = iter(keys)

    def u(k, shape, scale):
        return jax.random.uniform(k, shape, jnp.float32, -scale, scale)

    s1 = 1.0 / (I ** 0.5)      # Conv1d default init scale (kernel_size=1)
    sH = 1.0 / (H ** 0.5)      # LSTM default init scale

    params = {
        "w1": u(next(it), (I, H), s1),     # first_linear weight (stored (Cin, Cout))
        "b1": u(next(it), (1, H), s1),     # first_linear bias
        "lstm": [],
    }
    for _ in range(L):
        wih_f = u(next(it), (H, 4 * H), sH)   # stored transposed: x @ wih, gate order i,f,g,o
        whh_f = u(next(it), (H, 4 * H), sH)
        wih_b = u(next(it), (H, 4 * H), sH)
        whh_b = u(next(it), (H, 4 * H), sH)
        whh_bd = jnp.zeros((2 * H, 8 * H), jnp.float32)
        whh_bd = whh_bd.at[:H, :4 * H].set(whh_f).at[H:, 4 * H:].set(whh_b)
        params["lstm"].append({
            # f32 copies for the pure-JAX reference
            "wih_f": wih_f, "wih_b": wih_b, "whh_f": whh_f, "whh_b": whh_b,
            # kernel operands, pre-cast to the MXU dtype
            "w_ih_cat_mm": jnp.concatenate([wih_f, wih_b], axis=1).astype(MATMUL_DTYPE),  # (H, 8H)
            "whh_bd_mm": whh_bd.astype(MATMUL_DTYPE),                                     # (2H, 8H)
        })
    params["w2"] = u(next(it), (1, H), sH)    # last_linear weight (row vector)
    params["b2"] = u(next(it), (1, 1), sH)    # last_linear bias
    return params


# ----------------------------- full forward (Pallas kernels + free reshapes) -----------------------------

def rnn_base_classifier_forward(x, params):
    B = x.shape[0]
    I = x.shape[-2]
    T = x.shape[-1]
    x = x.reshape(B, I, T).astype(jnp.float32)            # x.view(B, I, T)
    H = params["w1"].shape[1]

    # zero-pad batch to a multiple of 8: batch rows are independent everywhere, padded rows are
    # dropped at the end; this keeps every (Bb, H) block sublane-aligned.
    B_pad = max(8, ((B + 7) // 8) * 8)
    if B_pad != B:
        x = jnp.pad(x, ((0, B_pad - B), (0, 0), (0, 0)))

    vmem_limit = _vmem_limit_bytes()
    Bb = _batch_block(B_pad, T, H, vmem_limit)

    # single input transpose -> seq-first channels-last; reshapes below only merge/split leading dims.
    xt = jnp.transpose(x, (2, 0, 1)).reshape(T * B_pad, I)               # (T*Bp, I)
    h = first_linear(xt, params["w1"], params["b1"], vmem_limit=vmem_limit)
    h = h.reshape(T, B_pad, H)                                           # seq-first

    for layer in params["lstm"]:
        h = bilstm_residual(h, layer["w_ih_cat_mm"], layer["whh_bd_mm"],
                            Bb=Bb, vmem_limit=vmem_limit)                # (T, Bp, H)

    y = last_linear_sigmoid(h, params["w2"], params["b2"], vmem_limit=vmem_limit)   # (Bp, T)
    return y[:B]


# ----------------------------- pure-JAX reference -----------------------------
# matmul_dtype / gx_dtype mirror the kernel's quantization; with float32 it is the exact
# PyTorch-equivalent f32 forward.

def reference_forward(x, params, matmul_dtype=jnp.float32, gx_dtype=jnp.float32):
    B = x.shape[0]
    I = x.shape[-2]
    T = x.shape[-1]
    x = x.reshape(B, I, T).astype(jnp.float32)
    H = params["w1"].shape[1]

    h = jnp.einsum('bit,ih->tbh', x, params["w1"]) + params["b1"][0]    # (T, B, H)

    def run_dir(seq, wih, whh):
        gx = jnp.einsum('tbh,hg->tbg', seq.astype(matmul_dtype), wih.astype(matmul_dtype),
                        preferred_element_type=jnp.float32)
        gx = gx.astype(gx_dtype).astype(jnp.float32)          # mirror gx storage rounding
        whh_md = whh.astype(matmul_dtype)

        def step(carry, gx_t):
            hh, cc = carry
            gates = gx_t + jnp.dot(hh.astype(matmul_dtype), whh_md,
                                   preferred_element_type=jnp.float32)
            i_g = jax.nn.sigmoid(gates[:, :H])
            f_g = jax.nn.sigmoid(gates[:, H:2 * H])
            g_g = jnp.tanh(gates[:, 2 * H:3 * H])
            o_g = jax.nn.sigmoid(gates[:, 3 * H:])
            cc = f_g * cc + i_g * g_g
            hh = o_g * jnp.tanh(cc)
            return (hh, cc), hh

        init = (jnp.zeros((B, H), jnp.float32), jnp.zeros((B, H), jnp.float32))
        _, out = lax.scan(step, init, gx)
        return out

    for layer in params["lstm"]:
        f_out = run_dir(h, layer["wih_f"], layer["whh_f"])
        b_out = run_dir(h[::-1], layer["wih_b"], layer["whh_b"])[::-1]
        h = f_out + b_out + h

    y = jax.nn.sigmoid(jnp.einsum('tbh,h->bt', h, params["w2"][0]) + params["b2"][0, 0])
    return y


if __name__ == "__main__":
    # H = 128 keeps the i/f/g/o gate slices lane-aligned (multiples of 128 lanes).
    B, I, T, H, L = 2, 4, 16, 128, 3
    key = jax.random.PRNGKey(0)
    k_in, k_p = jax.random.split(key)

    # module does x.view(B, shape[-2], shape[-1]); feed (B, 1, I, T) like a spectrogram
    x = jax.random.normal(k_in, (B, 1, I, T), jnp.float32)
    params = init_params(k_p, I, H, L)

    out = jax.block_until_ready(rnn_base_classifier_forward(x, params))
    assert out.shape == (B, T), out.shape

    # tight check against a reference that mirrors the kernel's bf16 matmul / gx quantization
    ref_q = reference_forward(x, params, matmul_dtype=MATMUL_DTYPE, gx_dtype=GX_DTYPE)
    assert jnp.allclose(out, ref_q, atol=2e-3, rtol=2e-3), float(jnp.max(jnp.abs(out - ref_q)))

    # loose check against the exact f32 reference (bounds total bf16 quantization drift)
    ref_f32 = reference_forward(x, params)
    assert jnp.allclose(out, ref_f32, atol=1e-1, rtol=1e-1), float(jnp.max(jnp.abs(out - ref_f32)))

    print("KERNEL_OK")
</pallas_src>

<mosaic_0001>
module attributes {stable_mosaic.version = 11 : i64} {
  func.func @_first_linear_kernel(%arg0: i32, %arg1: memref<128x4xf32, #tpu.memory_space<vmem>>, %arg2: memref<4x128xf32, #tpu.memory_space<vmem>>, %arg3: memref<1x128xf32, #tpu.memory_space<vmem>>, %arg4: memref<128x128xf32, #tpu.memory_space<vmem>>) attributes {dimension_semantics = [#tpu.dimension_semantics<parallel>], iteration_bounds = array<i64: 1>, scalar_prefetch = 0 : i64, scratch_operands = 0 : i64, tpu.core_type = #tpu.core_type<tc>, window_params = [{transform_indices = @transform_0, window_bounds = array<i64: 128, 4>}, {pipeline_mode = #tpu.pipeline_mode<synchronous>, transform_indices = @transform_1, window_bounds = array<i64: 4, 128>}, {pipeline_mode = #tpu.pipeline_mode<synchronous>, transform_indices = @transform_2, window_bounds = array<i64: 1, 128>}, {transform_indices = @transform_3, window_bounds = array<i64: 128, 128>}]} {
    %c0 = arith.constant 0 : index
    %c0_0 = arith.constant 0 : index
    %0 = vector.load %arg3[%c0, %c0_0] : memref<1x128xf32, #tpu.memory_space<vmem>>, vector<1x128xf32>
    %1 = vector.shape_cast %0 : vector<1x128xf32> to vector<1x128xf32>
    %2 = vector.broadcast %1 : vector<1x128xf32> to vector<128x128xf32>
    %c0_1 = arith.constant 0 : index
    %c0_2 = arith.constant 0 : index
    %3 = vector.load %arg1[%c0_1, %c0_2] : memref<128x4xf32, #tpu.memory_space<vmem>>, vector<128x1xf32>
    %c0_3 = arith.constant 0 : index
    %c0_4 = arith.constant 0 : index
    %4 = vector.load %arg2[%c0_3, %c0_4] : memref<4x128xf32, #tpu.memory_space<vmem>>, vector<1x128xf32>
    %5 = vector.broadcast %3 : vector<128x1xf32> to vector<128x128xf32>
    %6 = vector.broadcast %4 : vector<1x128xf32> to vector<128x128xf32>
    %7 = arith.mulf %5, %6 : vector<128x128xf32>
    %8 = arith.addf %2, %7 : vector<128x128xf32>
    %c0_5 = arith.constant 0 : index
    %c1 = arith.constant 1 : index
    %9 = vector.load %arg1[%c0_5, %c1] : memref<128x4xf32, #tpu.memory_space<vmem>>, vector<128x1xf32>
    %c1_6 = arith.constant 1 : index
    %c0_7 = arith.constant 0 : index
    %10 = vector.load %arg2[%c1_6, %c0_7] : memref<4x128xf32, #tpu.memory_space<vmem>>, vector<1x128xf32>
    %11 = vector.broadcast %9 : vector<128x1xf32> to vector<128x128xf32>
    %12 = vector.broadcast %10 : vector<1x128xf32> to vector<128x128xf32>
    %13 = arith.mulf %11, %12 : vector<128x128xf32>
    %14 = arith.addf %8, %13 : vector<128x128xf32>
    %c0_8 = arith.constant 0 : index
    %c2 = arith.constant 2 : index
    %15 = vector.load %arg1[%c0_8, %c2] : memref<128x4xf32, #tpu.memory_space<vmem>>, vector<128x1xf32>
    %c2_9 = arith.constant 2 : index
    %c0_10 = arith.constant 0 : index
    %16 = vector.load %arg2[%c2_9, %c0_10] : memref<4x128xf32, #tpu.memory_space<vmem>>, vector<1x128xf32>
    %17 = vector.broadcast %15 : vector<128x1xf32> to vector<128x128xf32>
    %18 = vector.broadcast %16 : vector<1x128xf32> to vector<128x128xf32>
    %19 = arith.mulf %17, %18 : vector<128x128xf32>
    %20 = arith.addf %14, %19 : vector<128x128xf32>
    %c0_11 = arith.constant 0 : index
    %c3 = arith.constant 3 : index
    %21 = vector.load %arg1[%c0_11, %c3] : memref<128x4xf32, #tpu.memory_space<vmem>>, vector<128x1xf32>
    %c3_12 = arith.constant 3 : index
    %c0_13 = arith.constant 0 : index
    %22 = vector.load %arg2[%c3_12, %c0_13] : memref<4x128xf32, #tpu.memory_space<vmem>>, vector<1x128xf32>
    %23 = vector.broadcast %21 : vector<128x1xf32> to vector<128x128xf32>
    %24 = vector.broadcast %22 : vector<1x128xf32> to vector<128x128xf32>
    %25 = arith.mulf %23, %24 : vector<128x128xf32>
    %26 = arith.addf %20, %25 : vector<128x128xf32>
    %c0_14 = arith.constant 0 : index
    %c0_15 = arith.constant 0 : index
    %27 = vector.load %arg4[%c0_14, %c0_15] : memref<128x128xf32, #tpu.memory_space<vmem>>, vector<128x128xf32>
    tpu.vector_store %arg4[%c0_14, %c0_15], %26 {strides = array<i32>} : memref<128x128xf32, #tpu.memory_space<vmem>>, vector<128x128xf32>,
    return
  }
  func.func @transform_0(%arg0: i32) -> (i32, i32) {
    %c0_i32 = arith.constant 0 : i32
    %c0_i32_0 = arith.constant 0 : i32
    return %arg0, %c0_i32 : i32, i32
  }
  func.func @transform_1(%arg0: i32) -> (i32, i32) {
    %c0_i32 = arith.constant 0 : i32
    %c0_i32_0 = arith.constant 0 : i32
    %c0_i32_1 = arith.constant 0 : i32
    return %c0_i32, %c0_i32_0 : i32, i32
  }
  func.func @transform_2(%arg0: i32) -> (i32, i32) {
    %c0_i32 = arith.constant 0 : i32
    %c0_i32_0 = arith.constant 0 : i32
    %c0_i32_1 = arith.constant 0 : i32
    return %c0_i32, %c0_i32_0 : i32, i32
  }
  func.func @transform_3(%arg0: i32) -> (i32, i32) {
    %c0_i32 = arith.constant 0 : i32
    %c0_i32_0 = arith.constant 0 : i32
    return %arg0, %c0_i32 : i32, i32
  }
}

</mosaic_0001>

<llo_original>
// kernel: tpu_custom_call.1
$region0: #{tpu_custom_call.1}
  #allocation0 [shape = 'u32[]', space=smem, size = 0x4, offset = 0x4, fixed_abs, tag = 'smem constant byte address 0x4 - core index']
  #allocation1 [shape = 'u32[144,128]{1,0:T(1,128)}', space=vmem, size = 0x12000, scoped, tag = 'internal scratch']
  %s0 = inlined_call_operand.vmem [shape: f32[128,4], index: 0, kind: input, shape index: {}]
  %s1 = inlined_call_operand.vmem [shape: f32[4,128], index: 1, kind: input, shape index: {}]
  %s2 = inlined_call_operand.vmem [shape: f32[1,128], index: 2, kind: input, shape index: {}]
  %s3 = inlined_call_operand.hbm [shape: f32[128,128], index: 3, kind: output, shape index: {}]
  %s4 = sld [smem:[#allocation0]]
  $region22: #{tpu_custom_call.1} parent=0
    _
  %s6 = ssub.s32 1, %s4
  %s7 = scalar_select 0, %s6, %s4
  $region1: #{tpu_custom_call.1} parent=0
    #allocation2 [shape = 'u8[65536]{0}', space=vmem, size = 0x10000, scoped, tag = 'output window, operand 0, single buffered']
    #allocation3 [shape = 's32[1]{0}', space=sflag, size = 0x4, scoped, tag = 'scoped memory for tpu_custom_call.1']
    %8 = vsyncpa [#allocation3], 0
    // Predicated region
    $region2: #{tpu_custom_call.1} parent=1 // pred_check
      _
    $region3: #{tpu_custom_call.1} parent=1 // pred_check_branch
      %10 = sbr.rel (0) target = $region5
    $region4: #{tpu_custom_call.1} parent=1 // pred_region
      _
    $region5: #{tpu_custom_call.1} parent=1 // pred_fallthru
      _
    // Predicated region
    $region6: #{tpu_custom_call.1} parent=1 // pred_check
      _
    $region7: #{tpu_custom_call.1} parent=1 // pred_check_branch
      %12 = sbr.rel (0) target = $region9
    $region8: #{tpu_custom_call.1} parent=1 // pred_region
      _
    $region9: #{tpu_custom_call.1} parent=1 // pred_fallthru
      _
    // Predicated region
    $region10: #{tpu_custom_call.1} parent=1 // pred_check
      _
    $region11: #{tpu_custom_call.1} parent=1 // pred_check_branch
      %14 = sbr.rel (0) target = $region13
    $region12: #{tpu_custom_call.1} parent=1 // pred_region
      _
    $region13: #{tpu_custom_call.1} parent=1 // pred_fallthru
      _
    %v15 = vld [vmem:[%s2] sm:$0x1]
    %v17 = vlaneseq
    %v18 = vshrl.u32 %v17, 7
    %v19 = vsub.s32 0, %v18
    %v20 = vrot.slane %v15, %v19
    %v22 = vld [vmem:[%s0] sm:$0xff]
    %v23 = vld [vmem:[%s0 + $0x8] sm:$0xff]
    %v24 = vld [vmem:[%s0 + $0x10] sm:$0xff]
    %v25 = vld [vmem:[%s0 + $0x18] sm:$0xff]
    %v26 = vld [vmem:[%s0 + $0x20] sm:$0xff]
    %v27 = vld [vmem:[%s0 + $0x28] sm:$0xff]
    %v28 = vld [vmem:[%s0 + $0x30] sm:$0xff]
    %v29 = vld [vmem:[%s0 + $0x38] sm:$0xff]
    %v30 = vld [vmem:[%s0 + $0x40] sm:$0xff]
    %v31 = vld [vmem:[%s0 + $0x48] sm:$0xff]
    %v32 = vld [vmem:[%s0 + $0x50] sm:$0xff]
    %v33 = vld [vmem:[%s0 + $0x58] sm:$0xff]
    %v34 = vld [vmem:[%s0 + $0x60] sm:$0xff]
    %v35 = vld [vmem:[%s0 + $0x68] sm:$0xff]
    %v36 = vld [vmem:[%s0 + $0x70] sm:$0xff]
    %v37 = vld [vmem:[%s0 + $0x78] sm:$0xff]
    %v38 = vld [vmem:[%s1] sm:$0x1]
    %40 = vset.pattern.permute.xlu0 0
    %41 = vperm.xlu0 %40, %v22
    %v42 = vpop.permute.xlu0 %41
    %45 = vset.pattern.permute.xlu0 0
    %46 = vperm.xlu0 %45, %v23
    %v47 = vpop.permute.xlu0 %46
    %50 = vset.pattern.permute.xlu0 0
    %51 = vperm.xlu0 %50, %v24
    %v52 = vpop.permute.xlu0 %51
    %55 = vset.pattern.permute.xlu0 0
    %56 = vperm.xlu0 %55, %v25
    %v57 = vpop.permute.xlu0 %56
    %60 = vset.pattern.permute.xlu0 0
    %61 = vperm.xlu0 %60, %v26
    %v62 = vpop.permute.xlu0 %61
    %65 = vset.pattern.permute.xlu0 0
    %66 = vperm.xlu0 %65, %v27
    %v67 = vpop.permute.xlu0 %66
    %70 = vset.pattern.permute.xlu0 0
    %71 = vperm.xlu0 %70, %v28
    %v72 = vpop.permute.xlu0 %71
    %75 = vset.pattern.permute.xlu0 0
    %76 = vperm.xlu0 %75, %v29
    %v77 = vpop.permute.xlu0 %76
    %80 = vset.pattern.permute.xlu0 0
    %81 = vperm.xlu0 %80, %v30
    %v82 = vpop.permute.xlu0 %81
    %85 = vset.pattern.permute.xlu0 0
    %86 = vperm.xlu0 %85, %v31
    %v87 = vpop.permute.xlu0 %86
    %90 = vset.pattern.permute.xlu0 0
    %91 = vperm.xlu0 %90, %v32
    %v92 = vpop.permute.xlu0 %91
    %95 = vset.pattern.permute.xlu0 0
    %96 = vperm.xlu0 %95, %v33
    %v97 = vpop.permute.xlu0 %96
    %100 = vset.pattern.permute.xlu0 0
    %101 = vperm.xlu0 %100, %v34
    %v102 = vpop.permute.xlu0 %101
    %105 = vset.pattern.permute.xlu0 0
    %106 = vperm.xlu0 %105, %v35
    %v107 = vpop.permute.xlu0 %106
    %110 = vset.pattern.permute.xlu0 0
    %111 = vperm.xlu0 %110, %v36
    %v112 = vpop.permute.xlu0 %111
    %115 = vset.pattern.permute.xlu0 0
    %116 = vperm.xlu0 %115, %v37
    %v117 = vpop.permute.xlu0 %116
    %v119 = vlaneseq
    %v120 = vshrl.u32 %v119, 7
    %v121 = vsub.s32 0, %v120
    %v122 = vrot.slane %v38, %v121
    %v123 = vmul.f32 %v42, %v122
    %v124 = vmul.f32 %v47, %v122
    %v125 = vmul.f32 %v52, %v122
    %v126 = vmul.f32 %v57, %v122
    %v127 = vmul.f32 %v62, %v122
    %v128 = vmul.f32 %v67, %v122
    %v129 = vmul.f32 %v72, %v122
    %v130 = vmul.f32 %v77, %v122
    %v131 = vmul.f32 %v82, %v122
    %v132 = vmul.f32 %v87, %v122
    %v133 = vmul.f32 %v92, %v122
    %v134 = vmul.f32 %v97, %v122
    %v135 = vmul.f32 %v102, %v122
    %v136 = vmul.f32 %v107, %v122
    %v137 = vmul.f32 %v112, %v122
    %v138 = vmul.f32 %v117, %v122
    %v139 = vadd.f32 %v20, %v123
    %v140 = vadd.f32 %v20, %v124
    %v141 = vadd.f32 %v20, %v125
    %v142 = vadd.f32 %v20, %v126
    %v143 = vadd.f32 %v20, %v127
    %v144 = vadd.f32 %v20, %v128
    %v145 = vadd.f32 %v20, %v129
    %v146 = vadd.f32 %v20, %v130
    %v147 = vadd.f32 %v20, %v131
    %v148 = vadd.f32 %v20, %v132
    %v149 = vadd.f32 %v20, %v133
    %v150 = vadd.f32 %v20, %v134
    %v151 = vadd.f32 %v20, %v135
    %v152 = vadd.f32 %v20, %v136
    %v153 = vadd.f32 %v20, %v137
    %v154 = vadd.f32 %v20, %v138
    %v155 = vld [vmem:[%s1 + $0x1] sm:$0x1]
    %156 = vset.pattern.permute.xlu0 1
    %157 = vperm.xlu0 %156, %v22
    %v158 = vpop.permute.xlu0 %157
    %160 = vset.pattern.permute.xlu0 1
    %161 = vperm.xlu0 %160, %v23
    %v162 = vpop.permute.xlu0 %161
    %164 = vset.pattern.permute.xlu0 1
    %165 = vperm.xlu0 %164, %v24
    %v166 = vpop.permute.xlu0 %165
    %168 = vset.pattern.permute.xlu0 1
    %169 = vperm.xlu0 %168, %v25
    %v170 = vpop.permute.xlu0 %169
    %172 = vset.pattern.permute.xlu0 1
    %173 = vperm.xlu0 %172, %v26
    %v174 = vpop.permute.xlu0 %173
    %176 = vset.pattern.permute.xlu0 1
    %177 = vperm.xlu0 %176, %v27
    %v178 = vpop.permute.xlu0 %177
    %180 = vset.pattern.permute.xlu0 1
    %181 = vperm.xlu0 %180, %v28
    %v182 = vpop.permute.xlu0 %181
    %184 = vset.pattern.permute.xlu0 1
    %185 = vperm.xlu0 %184, %v29
    %v186 = vpop.permute.xlu0 %185
    %188 = vset.pattern.permute.xlu0 1
    %189 = vperm.xlu0 %188, %v30
    %v190 = vpop.permute.xlu0 %189
    %192 = vset.pattern.permute.xlu0 1
    %193 = vperm.xlu0 %192, %v31
    %v194 = vpop.permute.xlu0 %193
    %196 = vset.pattern.permute.xlu0 1
    %197 = vperm.xlu0 %196, %v32
    %v198 = vpop.permute.xlu0 %197
    %200 = vset.pattern.permute.xlu0 1
    %201 = vperm.xlu0 %200, %v33
    %v202 = vpop.permute.xlu0 %201
    %204 = vset.pattern.permute.xlu0 1
    %205 = vperm.xlu0 %204, %v34
    %v206 = vpop.permute.xlu0 %205
    %208 = vset.pattern.permute.xlu0 1
    %209 = vperm.xlu0 %208, %v35
    %v210 = vpop.permute.xlu0 %209
    %212 = vset.pattern.permute.xlu0 1
    %213 = vperm.xlu0 %212, %v36
    %v214 = vpop.permute.xlu0 %213
    %216 = vset.pattern.permute.xlu0 1
    %217 = vperm.xlu0 %216, %v37
    %v218 = vpop.permute.xlu0 %217
    %v220 = vlaneseq
    %v221 = vshrl.u32 %v220, 7
    %v222 = vsub.s32 0, %v221
    %v223 = vrot.slane %v155, %v222
    %v224 = vmul.f32 %v158, %v223
    %v225 = vmul.f32 %v162, %v223
    %v226 = vmul.f32 %v166, %v223
    %v227 = vmul.f32 %v170, %v223
    %v228 = vmul.f32 %v174, %v223
    %v229 = vmul.f32 %v178, %v223
    %v230 = vmul.f32 %v182, %v223
    %v231 = vmul.f32 %v186, %v223
    %v232 = vmul.f32 %v190, %v223
    %v233 = vmul.f32 %v194, %v223
    %v234 = vmul.f32 %v198, %v223
    %v235 = vmul.f32 %v202, %v223
    %v236 = vmul.f32 %v206, %v223
    %v237 = vmul.f32 %v210, %v223
    %v238 = vmul.f32 %v214, %v223
    %v239 = vmul.f32 %v218, %v223
    %v240 = vadd.f32 %v139, %v224
    %v241 = vadd.f32 %v140, %v225
    %v242 = vadd.f32 %v141, %v226
    %v243 = vadd.f32 %v142, %v227
    %v244 = vadd.f32 %v143, %v228
    %v245 = vadd.f32 %v144, %v229
    %v246 = vadd.f32 %v145, %v230
    %v247 = vadd.f32 %v146, %v231
    %v248 = vadd.f32 %v147, %v232
    %v249 = vadd.f32 %v148, %v233
    %v250 = vadd.f32 %v149, %v234
    %v251 = vadd.f32 %v150, %v235
    %v252 = vadd.f32 %v151, %v236
    %v253 = vadd.f32 %v152, %v237
    %v254 = vadd.f32 %v153, %v238
    %v255 = vadd.f32 %v154, %v239
    %v256 = vld [vmem:[%s1 + $0x2] sm:$0x1]
    %257 = vset.pattern.permute.xlu0 2
    %258 = vperm.xlu0 %257, %v22
    %v259 = vpop.permute.xlu0 %258
    %261 = vset.pattern.permute.xlu0 2
    %262 = vperm.xlu0 %261, %v23
    %v263 = vpop.permute.xlu0 %262
    %265 = vset.pattern.permute.xlu0 2
    %266 = vperm.xlu0 %265, %v24
    %v267 = vpop.permute.xlu0 %266
    %269 = vset.pattern.permute.xlu0 2
    %270 = vperm.xlu0 %269, %v25
    %v271 = vpop.permute.xlu0 %270
    %273 = vset.pattern.permute.xlu0 2
    %274 = vperm.xlu0 %273, %v26
    %v275 = vpop.permute.xlu0 %274
    %277 = vset.pattern.permute.xlu0 2
    %278 = vperm.xlu0 %277, %v27
    %v279 = vpop.permute.xlu0 %278
    %281 = vset.pattern.permute.xlu0 2
    %282 = vperm.xlu0 %281, %v28
    %v283 = vpop.permute.xlu0 %282
    %285 = vset.pattern.permute.xlu0 2
    %286 = vperm.xlu0 %285, %v29
    %v287 = vpop.permute.xlu0 %286
    %289 = vset.pattern.permute.xlu0 2
    %290 = vperm.xlu0 %289, %v30
    %v291 = vpop.permute.xlu0 %290
    %293 = vset.pattern.permute.xlu0 2
    %294 = vperm.xlu0 %293, %v31
    %v295 = vpop.permute.xlu0 %294
    %297 = vset.pattern.permute.xlu0 2
    %298 = vperm.xlu0 %297, %v32
    %v299 = vpop.permute.xlu0 %298
    %301 = vset.pattern.permute.xlu0 2
    %302 = vperm.xlu0 %301, %v33
    %v303 = vpop.permute.xlu0 %302
    %305 = vset.pattern.permute.xlu0 2
    %306 = vperm.xlu0 %305, %v34
    %v307 = vpop.permute.xlu0 %306
    %309 = vset.pattern.permute.xlu0 2
    %310 = vperm.xlu0 %309, %v35
    %v311 = vpop.permute.xlu0 %310
    %313 = vset.pattern.permute.xlu0 2
    %314 = vperm.xlu0 %313, %v36
    %v315 = vpop.permute.xlu0 %314
    %317 = vset.pattern.permute.xlu0 2
    %318 = vperm.xlu0 %317, %v37
    %v319 = vpop.permute.xlu0 %318
    %v321 = vlaneseq
    %v322 = vshrl.u32 %v321, 7
    %v323 = vsub.s32 0, %v322
    %v324 = vrot.slane %v256, %v323
    %v325 = vmul.f32 %v259, %v324
    %v326 = vmul.f32 %v263, %v324
    %v327 = vmul.f32 %v267, %v324
    %v328 = vmul.f32 %v271, %v324
    %v329 = vmul.f32 %v275, %v324
    %v330 = vmul.f32 %v279, %v324
    %v331 = vmul.f32 %v283, %v324
    %v332 = vmul.f32 %v287, %v324
    %v333 = vmul.f32 %v291, %v324
    %v334 = vmul.f32 %v295, %v324
    %v335 = vmul.f32 %v299, %v324
    %v336 = vmul.f32 %v303, %v324
    %v337 = vmul.f32 %v307, %v324
    %v338 = vmul.f32 %v311, %v324
    %v339 = vmul.f32 %v315, %v324
    %v340 = vmul.f32 %v319, %v324
    %v341 = vadd.f32 %v240, %v325
    %v342 = vadd.f32 %v241, %v326
    %v343 = vadd.f32 %v242, %v327
    %v344 = vadd.f32 %v243, %v328
    %v345 = vadd.f32 %v244, %v329
    %v346 = vadd.f32 %v245, %v330
    %v347 = vadd.f32 %v246, %v331
    %v348 = vadd.f32 %v247, %v332
    %v349 = vadd.f32 %v248, %v333
    %v350 = vadd.f32 %v249, %v334
    %v351 = vadd.f32 %v250, %v335
    %v352 = vadd.f32 %v251, %v336
    %v353 = vadd.f32 %v252, %v337
    %v354 = vadd.f32 %v253, %v338
    %v355 = vadd.f32 %v254, %v339
    %v356 = vadd.f32 %v255, %v340
    %v357 = vld [vmem:[%s1 + $0x3] sm:$0x1]
    %358 = vset.pattern.permute.xlu0 3
    %359 = vperm.xlu0 %358, %v22
    %v360 = vpop.permute.xlu0 %359
    %362 = vset.pattern.permute.xlu0 3
    %363 = vperm.xlu0 %362, %v23
    %v364 = vpop.permute.xlu0 %363
    %366 = vset.pattern.permute.xlu0 3
    %367 = vperm.xlu0 %366, %v24
    %v368 = vpop.permute.xlu0 %367
    %370 = vset.pattern.permute.xlu0 3
    %371 = vperm.xlu0 %370, %v25
    %v372 = vpop.permute.xlu0 %371
    %374 = vset.pattern.permute.xlu0 3
    %375 = vperm.xlu0 %374, %v26
    %v376 = vpop.permute.xlu0 %375
    %378 = vset.pattern.permute.xlu0 3
    %379 = vperm.xlu0 %378, %v27
    %v380 = vpop.permute.xlu0 %379
    %382 = vset.pattern.permute.xlu0 3
    %383 = vperm.xlu0 %382, %v28
    %v384 = vpop.permute.xlu0 %383
    %386 = vset.pattern.permute.xlu0 3
    %387 = vperm.xlu0 %386, %v29
    %v388 = vpop.permute.xlu0 %387
    %390 = vset.pattern.permute.xlu0 3
    %391 = vperm.xlu0 %390, %v30
    %v392 = vpop.permute.xlu0 %391
    %394 = vset.pattern.permute.xlu0 3
    %395 = vperm.xlu0 %394, %v31
    %v396 = vpop.permute.xlu0 %395
    %398 = vset.pattern.permute.xlu0 3
    %399 = vperm.xlu0 %398, %v32
    %v400 = vpop.permute.xlu0 %399
    %402 = vset.pattern.permute.xlu0 3
    %403 = vperm.xlu0 %402, %v33
    %v404 = vpop.permute.xlu0 %403
    %406 = vset.pattern.permute.xlu0 3
    %407 = vperm.xlu0 %406, %v34
    %v408 = vpop.permute.xlu0 %407
    %410 = vset.pattern.permute.xlu0 3
    %411 = vperm.xlu0 %410, %v35
    %v412 = vpop.permute.xlu0 %411
    %414 = vset.pattern.permute.xlu0 3
    %415 = vperm.xlu0 %414, %v36
    %v416 = vpop.permute.xlu0 %415
    %418 = vset.pattern.permute.xlu0 3
    %419 = vperm.xlu0 %418, %v37
    %v420 = vpop.permute.xlu0 %419
    %v422 = vlaneseq
    %v423 = vshrl.u32 %v422, 7
    %v424 = vsub.s32 0, %v423
    %v425 = vrot.slane %v357, %v424
    %v426 = vmul.f32 %v360, %v425
    %v427 = vmul.f32 %v364, %v425
    %v428 = vmul.f32 %v368, %v425
    %v429 = vmul.f32 %v372, %v425
    %v430 = vmul.f32 %v376, %v425
    %v431 = vmul.f32 %v380, %v425
    %v432 = vmul.f32 %v384, %v425
    %v433 = vmul.f32 %v388, %v425
    %v434 = vmul.f32 %v392, %v425
    %v435 = vmul.f32 %v396, %v425
    %v436 = vmul.f32 %v400, %v425
    %v437 = vmul.f32 %v404, %v425
    %v438 = vmul.f32 %v408, %v425
    %v439 = vmul.f32 %v412, %v425
    %v440 = vmul.f32 %v416, %v425
    %v441 = vmul.f32 %v420, %v425
    %v442 = vadd.f32 %v341, %v426
    %v443 = vadd.f32 %v342, %v427
    %v444 = vadd.f32 %v343, %v428
    %v445 = vadd.f32 %v344, %v429
    %v446 = vadd.f32 %v345, %v430
    %v447 = vadd.f32 %v346, %v431
    %v448 = vadd.f32 %v347, %v432
    %v449 = vadd.f32 %v348, %v433
    %v450 = vadd.f32 %v349, %v434
    %v451 = vadd.f32 %v350, %v435
    %v452 = vadd.f32 %v351, %v436
    %v453 = vadd.f32 %v352, %v437
    %v454 = vadd.f32 %v353, %v438
    %v455 = vadd.f32 %v354, %v439
    %v456 = vadd.f32 %v355, %v440
    %v457 = vadd.f32 %v356, %v441
    %458 = vst [vmem:[#allocation2] sm:$0xff] %v442
    %459 = vst [vmem:[#allocation2 + $0x8] sm:$0xff] %v443
    %460 = vst [vmem:[#allocation2 + $0x10] sm:$0xff] %v444
    %461 = vst [vmem:[#allocation2 + $0x18] sm:$0xff] %v445
    %462 = vst [vmem:[#allocation2 + $0x20] sm:$0xff] %v446
    %463 = vst [vmem:[#allocation2 + $0x28] sm:$0xff] %v447
    %464 = vst [vmem:[#allocation2 + $0x30] sm:$0xff] %v448
    %465 = vst [vmem:[#allocation2 + $0x38] sm:$0xff] %v449
    %466 = vst [vmem:[#allocation2 + $0x40] sm:$0xff] %v450
    %467 = vst [vmem:[#allocation2 + $0x48] sm:$0xff] %v451
    %468 = vst [vmem:[#allocation2 + $0x50] sm:$0xff] %v452
    %469 = vst [vmem:[#allocation2 + $0x58] sm:$0xff] %v453
    %470 = vst [vmem:[#allocation2 + $0x60] sm:$0xff] %v454
    %471 = vst [vmem:[#allocation2 + $0x68] sm:$0xff] %v455
    %472 = vst [vmem:[#allocation2 + $0x70] sm:$0xff] %v456
    %473 = vst [vmem:[#allocation2 + $0x78] sm:$0xff] %v457
    // Predicated region
    $region14: #{tpu_custom_call.1} parent=1 // pred_check
      _
    $region15: #{tpu_custom_call.1} parent=1 // pred_check_branch
      %475 = sbr.rel (0) target = $region17
    $region16: #{tpu_custom_call.1} parent=1 // pred_region
      %s477 = ssub.s32 2048, 2048
      %478 = vsyncadd [#allocation3], %s477
      %s479 = sshll.u32 [#allocation2], 4
      %s480 = int_to_ptr.vmem [resolvable:$true] %s479
      %485 = dma.vmem_to_hbm [thread:$0]  %s480, 2048, %s3, [#allocation3], 128, 128, 8
    $region17: #{tpu_custom_call.1} parent=1 // pred_fallthru
      _
    // Predicated region
    $region18: #{tpu_custom_call.1} parent=1 // pred_check
      _
    $region19: #{tpu_custom_call.1} parent=1 // pred_check_branch
      %487 = sbr.rel (0) target = $region21
    $region20: #{tpu_custom_call.1} parent=1 // pred_region
      %488 = dma.done [#allocation3], 2048
    $region21: #{tpu_custom_call.1} parent=1 // pred_fallthru
      _
    %489 = vsyncpa [#allocation3], 1

</llo_original>
